<compile_context>
chip_gen: v6e
topology: v6e:2x2x1
jax: 0.10.0
libtpu: 0.0.40
codegen_flags: <defaults>
</compile_context>

<pallas_src>
import jax
import jax.numpy as jnp
from jax.experimental import pallas as pl
from jax.experimental.pallas import tpu as pltpu


def _support_dynamic_conv_kernel(rep_ref, roi_ref, out_ref):
    """One grid step = (block_c classes) x (block_p pooled positions).

    rep_ref: (block_c, 1,       B*D)  VMEM tile (per-class multiplier, pre-tiled)
    roi_ref: (block_c, block_p, B*D)  VMEM tile
    out_ref: (block_c, block_p, B*D)  VMEM tile
    """
    # Pure broadcast multiply over the P axis; lane axis is the full B*D, so
    # loads/stores are dense and unmasked.
    out_ref[...] = roi_ref[...] * rep_ref[...]


def _pad8(n):
    return -(-n // 8) * 8


def _pad128(n):
    return -(-n // 128) * 128


def _device_kind():
    try:
        return jax.devices()[0].device_kind.lower()
    except Exception:
        return ""


def _tensorcores_per_chip():
    """Best-effort TensorCore count per chip (2 on v7x, 1 on v5e/v6e)."""
    try:
        info = pltpu.get_tpu_info()
        for name in ("tensorcores_per_chip", "num_tensorcores"):
            n = getattr(info, name, None)
            if isinstance(n, int) and 0 < n <= 8:
                return n
    except Exception:
        pass
    return 2 if "v7" in _device_kind() else 1


def _prefer_divisor(n, max_block):
    """Largest block <= max_block, preferring one that divides n exactly
    (avoids a ragged, mostly-masked tail tile) without over-shrinking."""
    max_block = max(1, min(n, max_block))
    for b in range(max_block, max(1, (3 * max_block) // 4) - 1, -1):
        if n % b == 0:
            return b
    return max_block


def _choose_blocks(C, P, BD, itemsize, *, num_cores, target_block_bytes,
                   vmem_budget_bytes):
    """Pick (block_c, block_p) honoring (8,128) tiling, VMEM padding,
    double-buffering and the per-core pipelining requirement."""
    bd_pad = _pad128(BD)

    def vmem_bytes(bc, bp):
        # roi + out tiles (each double-buffered by the pipeline) + rep tile.
        main = 2 * 2 * bc * _pad8(bp) * bd_pad * itemsize
        rep = 2 * bc * 8 * bd_pad * itemsize
        return main + rep

    if vmem_bytes(1, P) <= vmem_budget_bytes:
        # A full-P slab of at least one class fits: tile over classes only.
        block_p = P
        per_class_vmem = vmem_bytes(1, P)
        bc_vmem = max(1, vmem_budget_bytes // per_class_vmem)
        per_class_data = 2 * _pad8(P) * bd_pad * itemsize  # roi + out, one copy
        bc_target = max(1, target_block_bytes // per_class_data)
        bc_max = max(1, min(C, bc_vmem, bc_target))
        if num_cores > 1 and C >= 2 * num_cores:
            # >= 2 grid steps per TensorCore so each core's pipeline can fill;
            # otherwise (small C) fall back to the fewest, biggest steps.
            bc_max = min(bc_max, pl.cdiv(C, 2 * num_cores))
        block_c = _prefer_divisor(C, bc_max)
    else:
        # A single class overflows the VMEM budget: tile the P axis too
        # (block_p must be a multiple of 8, or equal to full P).
        block_c = 1
        per_row_data = 2 * bd_pad * itemsize
        bp = max(8, (target_block_bytes // per_row_data) // 8 * 8)
        bp = min(bp, _pad8(P))
        while bp > 8 and vmem_bytes(1, bp) > vmem_budget_bytes:
            bp -= 8
        block_p = P if bp >= P else bp

    return block_c, block_p, vmem_bytes(block_c, block_p)


def support_dynamic_conv(support_features, roi_features, *,
                         target_block_bytes=None,
                         vmem_budget_bytes=24 << 20,
                         donate_roi=False,
                         num_cores=None):
    """Pallas implementation of SupportDynamicConv.forward.

    support_features: (C, P, 1, D)
    roi_features:     (C, P, B, D)
    returns:          (C, P, B, D)  (dtype of roi_features)
    """
    C, P, _, D = support_features.shape
    _, _, B, _ = roi_features.shape
    BD = B * D

    if num_cores is None:
        num_cores = _tensorcores_per_chip()
    if target_block_bytes is None:
        # v7x HBM (~3.2 TB/s/TC) wants larger steps to amortize per-step cost.
        target_block_bytes = (8 << 20) if "v7" in _device_kind() else (2 << 20)

    # Mean over P, hoisted out of the kernel.  Matches torch:
    # support_features.mean(dim=1).view(C, d).
    support_rep = jnp.mean(support_features, axis=1).reshape(C, D)
    support_rep = support_rep.astype(roi_features.dtype)

    # Pre-tile multiplier to match the flattened (B*D) lane axis:
    # rep_tiled[c, 0, b*D + d] == support_rep[c, d].
    rep_tiled = jnp.tile(support_rep, (1, B)).reshape(C, 1, BD)

    # Lane-dense flatten of roi / out (free reshape: merges trailing dims).
    roi_flat = roi_features.reshape(C, P, BD)

    itemsize = jnp.dtype(roi_features.dtype).itemsize
    block_c, block_p, vmem_est = _choose_blocks(
        C, P, BD, itemsize,
        num_cores=num_cores,
        target_block_bytes=target_block_bytes,
        vmem_budget_bytes=vmem_budget_bytes,
    )
    grid_c = pl.cdiv(C, block_c)
    grid_p = pl.cdiv(P, block_p)

    compiler_kwargs = {"dimension_semantics": ("parallel", "parallel")}
    if vmem_est > (14 << 20):
        # Headroom above the v5e 16 MiB scoped default; still well under
        # physical VMEM on every generation (64 MiB on v7x).
        compiler_kwargs["vmem_limit_bytes"] = min(
            32 << 20, max(int(vmem_est * 1.25), 16 << 20))

    call_kwargs = {}
    if donate_roi:
        # roi_flat (input index 1) and the output have identical shape/dtype.
        call_kwargs["input_output_aliases"] = {1: 0}

    out_flat = pl.pallas_call(
        _support_dynamic_conv_kernel,
        out_shape=jax.ShapeDtypeStruct((C, P, BD), roi_features.dtype),
        grid=(grid_c, grid_p),
        in_specs=[
            pl.BlockSpec((block_c, 1, BD), lambda c, p: (c, 0, 0)),
            pl.BlockSpec((block_c, block_p, BD), lambda c, p: (c, p, 0)),
        ],
        out_specs=pl.BlockSpec((block_c, block_p, BD), lambda c, p: (c, p, 0)),
        compiler_params=pltpu.CompilerParams(**compiler_kwargs),
        **call_kwargs,
    )(rep_tiled, roi_flat)

    return out_flat.reshape(C, P, B, D)


def reference_forward(support_features, roi_features):
    """Pure-JAX reference mirroring the PyTorch forward."""
    C, P, _, D = support_features.shape
    support_rep = jnp.mean(support_features, axis=1).reshape(C, D)
    return jnp.einsum("cijk,ck->cijk", roi_features, support_rep)


if __name__ == "__main__":
    # cfg.MODEL.DiffusionDet.* (small synthetic config)
    HIDDEN_DIM = 32          # d_model
    C = 4                    # number of classes
    POOLER_RES = 49          # 7x7 pooled features
    NR_BOXES = 8             # N * nr_boxes

    key = jax.random.PRNGKey(0)
    ks, kr = jax.random.split(key)
    support_features = jax.random.normal(
        ks, (C, POOLER_RES, 1, HIDDEN_DIM), jnp.float32)
    roi_features = jax.random.normal(
        kr, (C, POOLER_RES, NR_BOXES, HIDDEN_DIM), jnp.float32)

    out = support_dynamic_conv(support_features, roi_features)
    out = jax.block_until_ready(out)

    ref = reference_forward(support_features, roi_features)
    assert out.shape == (C, POOLER_RES, NR_BOXES, HIDDEN_DIM)
    assert jnp.allclose(out, ref, atol=1e-5, rtol=1e-5), "mismatch vs reference"

    print("KERNEL_OK")
</pallas_src>

<mosaic_0001>
module attributes {stable_mosaic.version = 11 : i64} {
  func.func @_support_dynamic_conv_kernel(%arg0: i32, %arg1: i32, %arg2: memref<4x1x256xf32, #tpu.memory_space<vmem>>, %arg3: memref<4x49x256xf32, #tpu.memory_space<vmem>>, %arg4: memref<4x49x256xf32, #tpu.memory_space<vmem>>) attributes {dimension_semantics = [#tpu.dimension_semantics<parallel>, #tpu.dimension_semantics<parallel>], iteration_bounds = array<i64: 1, 1>, scalar_prefetch = 0 : i64, scratch_operands = 0 : i64, tpu.core_type = #tpu.core_type<tc>, window_params = [{transform_indices = @transform_0, window_bounds = array<i64: 4, 1, 256>}, {transform_indices = @transform_1, window_bounds = array<i64: 4, 49, 256>}, {transform_indices = @transform_2, window_bounds = array<i64: 4, 49, 256>}]} {
    %c0 = arith.constant 0 : index
    %c0_0 = arith.constant 0 : index
    %c0_1 = arith.constant 0 : index
    %0 = vector.load %arg3[%c0, %c0_0, %c0_1] : memref<4x49x256xf32, #tpu.memory_space<vmem>>, vector<4x49x256xf32>
    %c0_2 = arith.constant 0 : index
    %c0_3 = arith.constant 0 : index
    %c0_4 = arith.constant 0 : index
    %1 = vector.load %arg2[%c0_2, %c0_3, %c0_4] : memref<4x1x256xf32, #tpu.memory_space<vmem>>, vector<4x1x256xf32>
    %2 = vector.broadcast %1 : vector<4x1x256xf32> to vector<4x49x256xf32>
    %3 = arith.mulf %0, %2 : vector<4x49x256xf32>
    %c0_5 = arith.constant 0 : index
    %c0_6 = arith.constant 0 : index
    %c0_7 = arith.constant 0 : index
    %4 = vector.load %arg4[%c0_5, %c0_6, %c0_7] : memref<4x49x256xf32, #tpu.memory_space<vmem>>, vector<4x49x256xf32>
    tpu.vector_store %arg4[%c0_5, %c0_6, %c0_7], %3 {strides = array<i32>} : memref<4x49x256xf32, #tpu.memory_space<vmem>>, vector<4x49x256xf32>,
    return
  }
  func.func @transform_0(%arg0: i32, %arg1: i32) -> (i32, i32, i32) {
    %c0_i32 = arith.constant 0 : i32
    %c0_i32_0 = arith.constant 0 : i32
    %c0_i32_1 = arith.constant 0 : i32
    return %arg0, %c0_i32, %c0_i32_0 : i32, i32, i32
  }
  func.func @transform_1(%arg0: i32, %arg1: i32) -> (i32, i32, i32) {
    %c0_i32 = arith.constant 0 : i32
    %c0_i32_0 = arith.constant 0 : i32
    return %arg0, %arg1, %c0_i32 : i32, i32, i32
  }
  func.func @transform_2(%arg0: i32, %arg1: i32) -> (i32, i32, i32) {
    %c0_i32 = arith.constant 0 : i32
    %c0_i32_0 = arith.constant 0 : i32
    return %arg0, %arg1, %c0_i32 : i32, i32, i32
  }
}

</mosaic_0001>

<llo_original>
// kernel: tpu_custom_call.1
$region0: #{tpu_custom_call.1}
  #allocation0 [shape = 'u32[]', space=smem, size = 0x4, offset = 0x4, fixed_abs, tag = 'smem constant byte address 0x4 - core index']
  #allocation1 [shape = 'u32[144,128]{1,0:T(1,128)}', space=vmem, size = 0x12000, scoped, tag = 'internal scratch']
  %s0 = inlined_call_operand.vmem [shape: f32[4,1,256], index: 0, kind: input, shape index: {}]
  %s1 = inlined_call_operand.vmem [shape: f32[4,49,256], index: 1, kind: input, shape index: {}]
  %s2 = inlined_call_operand.vmem [shape: f32[4,49,256], index: 2, kind: output, shape index: {}]
  %s3 = sld [smem:[#allocation0]]
  $region18: #{tpu_custom_call.1} parent=0
    _
  %s5 = ssub.s32 1, %s3
  %s6 = scalar_select 0, %s5, %s3
  // Predicated region
  $region2: #{tpu_custom_call.1} parent=0 // pred_check
    _
  $region3: #{tpu_custom_call.1} parent=0 // pred_check_branch
    %8 = sbr.rel (0) target = $region5
  $region4: #{tpu_custom_call.1} parent=0 // pred_region
    _
  $region5: #{tpu_custom_call.1} parent=0 // pred_fallthru
    _
  // Predicated region
  $region6: #{tpu_custom_call.1} parent=0 // pred_check
    _
  $region7: #{tpu_custom_call.1} parent=0 // pred_check_branch
    %10 = sbr.rel (0) target = $region9
  $region8: #{tpu_custom_call.1} parent=0 // pred_region
    _
  $region9: #{tpu_custom_call.1} parent=0 // pred_fallthru
    _
  %v11 = vld [vmem:[%s1] sm:$0xff]
  %v12 = vld [vmem:[%s1 + $0x8] sm:$0xff]
  %v13 = vld [vmem:[%s1 + $0x10] sm:$0xff]
  %v14 = vld [vmem:[%s1 + $0x18] sm:$0xff]
  %v15 = vld [vmem:[%s1 + $0x20] sm:$0xff]
  %v16 = vld [vmem:[%s1 + $0x28] sm:$0xff]
  %v17 = vld [vmem:[%s1 + $0x30] sm:$0xff]
  %v18 = vld [vmem:[%s1 + $0x38] sm:$0xff]
  %v19 = vld [vmem:[%s1 + $0x40] sm:$0xff]
  %v20 = vld [vmem:[%s1 + $0x48] sm:$0xff]
  %v21 = vld [vmem:[%s1 + $0x50] sm:$0xff]
  %v22 = vld [vmem:[%s1 + $0x58] sm:$0xff]
  %v23 = vld [vmem:[%s1 + $0x60] sm:$0x1]
  %v24 = vld [vmem:[%s1 + $0x68] sm:$0x1]
  %v25 = vld [vmem:[%s1 + $0x70] sm:$0xff]
  %v26 = vld [vmem:[%s1 + $0x78] sm:$0xff]
  %v27 = vld [vmem:[%s1 + $0x80] sm:$0xff]
  %v28 = vld [vmem:[%s1 + $0x88] sm:$0xff]
  %v29 = vld [vmem:[%s1 + $0x90] sm:$0xff]
  %v30 = vld [vmem:[%s1 + $0x98] sm:$0xff]
  %v31 = vld [vmem:[%s1 + $0xa0] sm:$0xff]
  %v32 = vld [vmem:[%s1 + $0xa8] sm:$0xff]
  %v33 = vld [vmem:[%s1 + $0xb0] sm:$0xff]
  %v34 = vld [vmem:[%s1 + $0xb8] sm:$0xff]
  %v35 = vld [vmem:[%s1 + $0xc0] sm:$0xff]
  %v36 = vld [vmem:[%s1 + $0xc8] sm:$0xff]
  %v37 = vld [vmem:[%s1 + $0xd0] sm:$0x1]
  %v38 = vld [vmem:[%s1 + $0xd8] sm:$0x1]
  %v39 = vld [vmem:[%s1 + $0xe0] sm:$0xff]
  %v40 = vld [vmem:[%s1 + $0xe8] sm:$0xff]
  %v41 = vld [vmem:[%s1 + $0xf0] sm:$0xff]
  %v42 = vld [vmem:[%s1 + $0xf8] sm:$0xff]
  %v43 = vld [vmem:[%s1 + $0x100] sm:$0xff]
  %v44 = vld [vmem:[%s1 + $0x108] sm:$0xff]
  %v45 = vld [vmem:[%s1 + $0x110] sm:$0xff]
  %v46 = vld [vmem:[%s1 + $0x118] sm:$0xff]
  %v47 = vld [vmem:[%s1 + $0x120] sm:$0xff]
  %v48 = vld [vmem:[%s1 + $0x128] sm:$0xff]
  %v49 = vld [vmem:[%s1 + $0x130] sm:$0xff]
  %v50 = vld [vmem:[%s1 + $0x138] sm:$0xff]
  %v51 = vld [vmem:[%s1 + $0x140] sm:$0x1]
  %v52 = vld [vmem:[%s1 + $0x148] sm:$0x1]
  %v53 = vld [vmem:[%s1 + $0x150] sm:$0xff]
  %v54 = vld [vmem:[%s1 + $0x158] sm:$0xff]
  %v55 = vld [vmem:[%s1 + $0x160] sm:$0xff]
  %v56 = vld [vmem:[%s1 + $0x168] sm:$0xff]
  %v57 = vld [vmem:[%s1 + $0x170] sm:$0xff]
  %v58 = vld [vmem:[%s1 + $0x178] sm:$0xff]
  %v59 = vld [vmem:[%s1 + $0x180] sm:$0xff]
  %v60 = vld [vmem:[%s1 + $0x188] sm:$0xff]
  %v61 = vld [vmem:[%s1 + $0x190] sm:$0xff]
  %v62 = vld [vmem:[%s1 + $0x198] sm:$0xff]
  %v63 = vld [vmem:[%s1 + $0x1a0] sm:$0xff]
  %v64 = vld [vmem:[%s1 + $0x1a8] sm:$0xff]
  %v65 = vld [vmem:[%s1 + $0x1b0] sm:$0x1]
  %v66 = vld [vmem:[%s1 + $0x1b8] sm:$0x1]
  %v67 = vld [vmem:[%s0] sm:$0x3]
  %v68 = vld [vmem:[%s0 + $0x2] sm:$0x3]
  %v69 = vld [vmem:[%s0 + $0x4] sm:$0x3]
  %v70 = vld [vmem:[%s0 + $0x6] sm:$0x3]
  %v75 = vlaneseq
  %v76 = vshrl.u32 %v75, 7
  %v77 = vsub.s32 0, %v76
  %v78 = vrot.slane %v67, %v77
  %v79 = vlaneseq
  %v80 = vshrl.u32 %v79, 7
  %v81 = vsub.s32 1, %v80
  %v82 = vrot.slane %v67, %v81
  %v83 = vlaneseq
  %v84 = vshrl.u32 %v83, 7
  %v85 = vsub.s32 0, %v84
  %v86 = vrot.slane %v68, %v85
  %v87 = vlaneseq
  %v88 = vshrl.u32 %v87, 7
  %v89 = vsub.s32 1, %v88
  %v90 = vrot.slane %v68, %v89
  %v91 = vlaneseq
  %v92 = vshrl.u32 %v91, 7
  %v93 = vsub.s32 0, %v92
  %v94 = vrot.slane %v69, %v93
  %v95 = vlaneseq
  %v96 = vshrl.u32 %v95, 7
  %v97 = vsub.s32 1, %v96
  %v98 = vrot.slane %v69, %v97
  %v99 = vlaneseq
  %v100 = vshrl.u32 %v99, 7
  %v101 = vsub.s32 0, %v100
  %v102 = vrot.slane %v70, %v101
  %v103 = vlaneseq
  %v104 = vshrl.u32 %v103, 7
  %v105 = vsub.s32 1, %v104
  %v106 = vrot.slane %v70, %v105
  %v115 = vmul.f32 %v11, %v78
  %v116 = vmul.f32 %v12, %v82
  %v117 = vmul.f32 %v13, %v78
  %v118 = vmul.f32 %v14, %v82
  %v119 = vmul.f32 %v15, %v78
  %v120 = vmul.f32 %v16, %v82
  %v121 = vmul.f32 %v17, %v78
  %v122 = vmul.f32 %v18, %v82
  %v123 = vmul.f32 %v19, %v78
  %v124 = vmul.f32 %v20, %v82
  %v125 = vmul.f32 %v21, %v78
  %v126 = vmul.f32 %v22, %v82
  %v127 = vmul.f32 %v23, %v78
  %v128 = vmul.f32 %v24, %v82
  %v129 = vmul.f32 %v25, %v86
  %v130 = vmul.f32 %v26, %v90
  %v131 = vmul.f32 %v27, %v86
  %v132 = vmul.f32 %v28, %v90
  %v133 = vmul.f32 %v29, %v86
  %v134 = vmul.f32 %v30, %v90
  %v135 = vmul.f32 %v31, %v86
  %v136 = vmul.f32 %v32, %v90
  %v137 = vmul.f32 %v33, %v86
  %v138 = vmul.f32 %v34, %v90
  %v139 = vmul.f32 %v35, %v86
  %v140 = vmul.f32 %v36, %v90
  %v141 = vmul.f32 %v37, %v86
  %v142 = vmul.f32 %v38, %v90
  %v143 = vmul.f32 %v39, %v94
  %v144 = vmul.f32 %v40, %v98
  %v145 = vmul.f32 %v41, %v94
  %v146 = vmul.f32 %v42, %v98
  %v147 = vmul.f32 %v43, %v94
  %v148 = vmul.f32 %v44, %v98
  %v149 = vmul.f32 %v45, %v94
  %v150 = vmul.f32 %v46, %v98
  %v151 = vmul.f32 %v47, %v94
  %v152 = vmul.f32 %v48, %v98
  %v153 = vmul.f32 %v49, %v94
  %v154 = vmul.f32 %v50, %v98
  %v155 = vmul.f32 %v51, %v94
  %v156 = vmul.f32 %v52, %v98
  %v157 = vmul.f32 %v53, %v102
  %v158 = vmul.f32 %v54, %v106
  %v159 = vmul.f32 %v55, %v102
  %v160 = vmul.f32 %v56, %v106
  %v161 = vmul.f32 %v57, %v102
  %v162 = vmul.f32 %v58, %v106
  %v163 = vmul.f32 %v59, %v102
  %v164 = vmul.f32 %v60, %v106
  %v165 = vmul.f32 %v61, %v102
  %v166 = vmul.f32 %v62, %v106
  %v167 = vmul.f32 %v63, %v102
  %v168 = vmul.f32 %v64, %v106
  %v169 = vmul.f32 %v65, %v102
  %v170 = vmul.f32 %v66, %v106
  %171 = vst [vmem:[%s2] sm:$0xff] %v115
  %172 = vst [vmem:[%s2 + $0x8] sm:$0xff] %v116
  %173 = vst [vmem:[%s2 + $0x10] sm:$0xff] %v117
  %174 = vst [vmem:[%s2 + $0x18] sm:$0xff] %v118
  %175 = vst [vmem:[%s2 + $0x20] sm:$0xff] %v119
  %176 = vst [vmem:[%s2 + $0x28] sm:$0xff] %v120
  %177 = vst [vmem:[%s2 + $0x30] sm:$0xff] %v121
  %178 = vst [vmem:[%s2 + $0x38] sm:$0xff] %v122
  %179 = vst [vmem:[%s2 + $0x40] sm:$0xff] %v123
  %180 = vst [vmem:[%s2 + $0x48] sm:$0xff] %v124
  %181 = vst [vmem:[%s2 + $0x50] sm:$0xff] %v125
  %182 = vst [vmem:[%s2 + $0x58] sm:$0xff] %v126
  %183 = vst [vmem:[%s2 + $0x60] sm:$0x1] %v127
  %184 = vst [vmem:[%s2 + $0x68] sm:$0x1] %v128
  %185 = vst [vmem:[%s2 + $0x70] sm:$0xff] %v129
  %186 = vst [vmem:[%s2 + $0x78] sm:$0xff] %v130
  %187 = vst [vmem:[%s2 + $0x80] sm:$0xff] %v131
  %188 = vst [vmem:[%s2 + $0x88] sm:$0xff] %v132
  %189 = vst [vmem:[%s2 + $0x90] sm:$0xff] %v133
  %190 = vst [vmem:[%s2 + $0x98] sm:$0xff] %v134
  %191 = vst [vmem:[%s2 + $0xa0] sm:$0xff] %v135
  %192 = vst [vmem:[%s2 + $0xa8] sm:$0xff] %v136
  %193 = vst [vmem:[%s2 + $0xb0] sm:$0xff] %v137
  %194 = vst [vmem:[%s2 + $0xb8] sm:$0xff] %v138
  %195 = vst [vmem:[%s2 + $0xc0] sm:$0xff] %v139
  %196 = vst [vmem:[%s2 + $0xc8] sm:$0xff] %v140
  %197 = vst [vmem:[%s2 + $0xd0] sm:$0x1] %v141
  %198 = vst [vmem:[%s2 + $0xd8] sm:$0x1] %v142
  %199 = vst [vmem:[%s2 + $0xe0] sm:$0xff] %v143
  %200 = vst [vmem:[%s2 + $0xe8] sm:$0xff] %v144
  %201 = vst [vmem:[%s2 + $0xf0] sm:$0xff] %v145
  %202 = vst [vmem:[%s2 + $0xf8] sm:$0xff] %v146
  %203 = vst [vmem:[%s2 + $0x100] sm:$0xff] %v147
  %204 = vst [vmem:[%s2 + $0x108] sm:$0xff] %v148
  %205 = vst [vmem:[%s2 + $0x110] sm:$0xff] %v149
  %206 = vst [vmem:[%s2 + $0x118] sm:$0xff] %v150
  %207 = vst [vmem:[%s2 + $0x120] sm:$0xff] %v151
  %208 = vst [vmem:[%s2 + $0x128] sm:$0xff] %v152
  %209 = vst [vmem:[%s2 + $0x130] sm:$0xff] %v153
  %210 = vst [vmem:[%s2 + $0x138] sm:$0xff] %v154
  %211 = vst [vmem:[%s2 + $0x140] sm:$0x1] %v155
  %212 = vst [vmem:[%s2 + $0x148] sm:$0x1] %v156
  %213 = vst [vmem:[%s2 + $0x150] sm:$0xff] %v157
  %214 = vst [vmem:[%s2 + $0x158] sm:$0xff] %v158
  %215 = vst [vmem:[%s2 + $0x160] sm:$0xff] %v159
  %216 = vst [vmem:[%s2 + $0x168] sm:$0xff] %v160
  %217 = vst [vmem:[%s2 + $0x170] sm:$0xff] %v161
  %218 = vst [vmem:[%s2 + $0x178] sm:$0xff] %v162
  %219 = vst [vmem:[%s2 + $0x180] sm:$0xff] %v163
  %220 = vst [vmem:[%s2 + $0x188] sm:$0xff] %v164
  %221 = vst [vmem:[%s2 + $0x190] sm:$0xff] %v165
  %222 = vst [vmem:[%s2 + $0x198] sm:$0xff] %v166
  %223 = vst [vmem:[%s2 + $0x1a0] sm:$0xff] %v167
  %224 = vst [vmem:[%s2 + $0x1a8] sm:$0xff] %v168
  %225 = vst [vmem:[%s2 + $0x1b0] sm:$0x1] %v169
  %226 = vst [vmem:[%s2 + $0x1b8] sm:$0x1] %v170
  // Predicated region
  $region10: #{tpu_custom_call.1} parent=0 // pred_check
    _
  $region11: #{tpu_custom_call.1} parent=0 // pred_check_branch
    %228 = sbr.rel (0) target = $region13
  $region12: #{tpu_custom_call.1} parent=0 // pred_region
    _
  $region13: #{tpu_custom_call.1} parent=0 // pred_fallthru
    _
  // Predicated region
  $region14: #{tpu_custom_call.1} parent=0 // pred_check
    _
  $region15: #{tpu_custom_call.1} parent=0 // pred_check_branch
    %230 = sbr.rel (0) target = $region17
  $region16: #{tpu_custom_call.1} parent=0 // pred_region
    _
  $region17: #{tpu_custom_call.1} parent=0 // pred_fallthru
    _

</llo_original>
